<compile_context>
chip_gen: v7x
topology: tpu7x:2x2x1
jax: 0.10.0
libtpu: 0.0.40
codegen_flags: <defaults>
</compile_context>

<pallas_src>
import functools

import numpy as np
import jax
import jax.numpy as jnp
from jax.experimental import pallas as pl
from jax.experimental.pallas import tpu as pltpu

_LANE = 128       # vreg lane width (last dim)
_SUBLANE = 8      # f32 sublane count (second-to-last dim)


def _round_up(x, m):
    return ((x + m - 1) // m) * m


_NONLIN = {
    "tanh": jnp.tanh,
    "relu": lambda x: jnp.maximum(x, jnp.zeros_like(x)),
    "sigmoid": jax.nn.sigmoid,
    "softplus": jax.nn.softplus,
    "selu": jax.nn.selu,
    "elu": jax.nn.elu,
    "swish": lambda x: x * jax.nn.sigmoid(x),
}


# ---------------------------------------------------------------------------
# Per-generation policy
# ---------------------------------------------------------------------------
def _device_kind():
    try:
        return jax.devices()[0].device_kind.lower()
    except Exception:
        return ""


def _compute_dtype(kind=None):
    """bf16 MXU operands everywhere the MXU natively supports them (v5e and newer)."""
    kind = _device_kind() if kind is None else kind
    for old in ("v2", "v3", "v4"):
        if old in kind:
            return jnp.float32
    return jnp.bfloat16


def _act_dtype(kind=None):
    """bf16 VPU/EUP only exists on v6e / v7x; activations stay f32 elsewhere."""
    kind = _device_kind() if kind is None else kind
    if ("v6" in kind) or ("v7" in kind):
        return jnp.bfloat16
    return jnp.float32


def _vmem_limit_bytes(kind=None):
    """Scoped-VMEM budget per generation (physical: 64 MiB v7x, 128 MiB v4-v6, 16 MiB v2/v3)."""
    kind = _device_kind() if kind is None else kind
    if ("v2" in kind) or ("v3" in kind):
        phys = 16 * 1024 * 1024
    elif "v7" in kind:
        phys = 64 * 1024 * 1024
    else:
        phys = 128 * 1024 * 1024
    return int(phys * 0.75)   # ~96 MiB on v5e/v6e, ~48 MiB on v7x


# ---------------------------------------------------------------------------
# Parameter init (torch.nn.Linear + orthogonal_ equivalent) and layout plumbing
# ---------------------------------------------------------------------------
def _orthogonal(key, rows, cols, dtype=jnp.float32):
    """Deterministic orthogonal init, mimicking torch.nn.init.orthogonal_."""
    big, small = max(rows, cols), min(rows, cols)
    a = jax.random.normal(key, (big, small), dtype=jnp.float32)
    q, r = jnp.linalg.qr(a)
    d = jnp.diagonal(r)
    q = q * jnp.where(d == 0, 1.0, jnp.sign(d))[None, :]
    if rows < cols:
        q = q.T
    return q.astype(dtype)


def init_mlp_params(key, input_dim, hidden_dim, output_dim, bias_bool=True):
    """torch.nn.Linear-equivalent params; weights stored as (in, out) so y = x @ W + b."""
    k1, k2, k3, kb1, kb2, kb3 = jax.random.split(key, 6)
    w1 = _orthogonal(k1, hidden_dim, input_dim).T
    w2 = _orthogonal(k2, hidden_dim, hidden_dim).T
    w3 = _orthogonal(k3, output_dim, hidden_dim).T
    # torch Linear bias default init: U(-1/sqrt(fan_in), 1/sqrt(fan_in)).
    b1 = jax.random.uniform(kb1, (1, hidden_dim), minval=-1.0, maxval=1.0) / jnp.sqrt(input_dim)
    b2 = jax.random.uniform(kb2, (1, hidden_dim), minval=-1.0, maxval=1.0) / jnp.sqrt(hidden_dim)
    if bias_bool:
        b3 = jax.random.uniform(kb3, (1, output_dim), minval=-1.0, maxval=1.0) / jnp.sqrt(hidden_dim)
    else:
        b3 = jnp.zeros((1, output_dim), jnp.float32)
    return dict(w1=w1, b1=b1, w2=w2, b2=b2, w3=w3, b3=b3)


def prepare_mlp_params(params, compute_dtype=None):
    """One-time layout plumbing (outside the kernel):
       * zero-pad hidden and output feature dims to multiples of 128 so every
         intermediate and output slab is lane-dense. Padding is exact: padded
         hidden units see zero weight rows/cols and zero bias.
       * cast matmul operands to the per-generation compute dtype (biases stay f32)."""
    if compute_dtype is None:
        compute_dtype = _compute_dtype()
    input_dim, hidden_dim = params["w1"].shape
    output_dim = params["w3"].shape[1]
    hpad = _round_up(hidden_dim, _LANE)
    opad = _round_up(output_dim, _LANE)

    def pad2(a, rows, cols):
        z = jnp.zeros((rows, cols), jnp.float32)
        return z.at[: a.shape[0], : a.shape[1]].set(a.astype(jnp.float32))

    prepared = dict(
        w1=pad2(params["w1"], input_dim, hpad).astype(compute_dtype),
        w2=pad2(params["w2"], hpad, hpad).astype(compute_dtype),
        w3=pad2(params["w3"], hpad, opad).astype(compute_dtype),
        b1=pad2(params["b1"], 1, hpad),
        b2=pad2(params["b2"], 1, hpad),
        b3=pad2(params["b3"], 1, opad),
    )
    return prepared, output_dim, compute_dtype


# ---------------------------------------------------------------------------
# Kernels
# ---------------------------------------------------------------------------
def _mlp_kernel(x_ref, w1_ref, b1_ref, w2_ref, b2_ref, w3_ref, b3_ref, o_ref,
                *, act_name, act_dtype):
    """Fused linear1 -> act -> linear2 -> act -> linear3 on one batch tile."""
    act = _NONLIN[act_name]
    w_dtype = w1_ref.dtype
    # In-kernel cast of the streamed f32 tile (hides under the MXU).
    x = x_ref[...].astype(w_dtype)
    # MXU matmuls with f32 accumulation; bias-add in f32; activation in act_dtype
    # (bf16 EUP on v6e/v7x, f32 elsewhere).
    h = jnp.dot(x, w1_ref[...], preferred_element_type=jnp.float32) + b1_ref[...]
    h = act(h.astype(act_dtype)).astype(w_dtype)
    h = jnp.dot(h, w2_ref[...], preferred_element_type=jnp.float32) + b2_ref[...]
    h = act(h.astype(act_dtype)).astype(w_dtype)
    out = jnp.dot(h, w3_ref[...], preferred_element_type=jnp.float32) + b3_ref[...]
    o_ref[...] = out.astype(o_ref.dtype)


def _layer_kernel(x_ref, w_ref, b_ref, o_ref, *, act_name, act_dtype):
    """Single linear (+ optional activation) tile: fallback path for huge weights."""
    w_dtype = w_ref.dtype
    y = jnp.dot(x_ref[...].astype(w_dtype), w_ref[...],
                preferred_element_type=jnp.float32) + b_ref[...]
    if act_name is not None:
        y = _NONLIN[act_name](y.astype(act_dtype))
    o_ref[...] = y.astype(o_ref.dtype)


# ---------------------------------------------------------------------------
# Wrappers
# ---------------------------------------------------------------------------
def _choose_batch_tile(batch, input_dim, hidden_pad, out_pad, compute_dtype,
                       vmem_budget, w_bytes, block_batch):
    itemsize = np.dtype(compute_dtype).itemsize
    pack = 16 if itemsize == 2 else 8                       # bf16 packs 16 rows / vreg
    usable = int(vmem_budget * 0.9) - 2 * 1024 * 1024 - w_bytes   # scratch margin

    def tile_bytes(t):
        io = 2 * (t * input_dim * 4 + t * out_pad * 4)      # double-buffered x / out tiles
        inter = 2 * t * hidden_pad * (4 + itemsize)         # f32 + compute-dtype intermediates
        return io + inter

    tb = min(_round_up(block_batch, pack), _round_up(batch, pack))
    if tb >= 512:
        tb = (tb // 256) * 256                              # MXU-aligned M when batch allows
    while tb > pack and tile_bytes(tb) > max(usable, 0):
        tb = max(pack, _round_up(tb // 2, pack))
    tb = min(tb, _round_up(batch, _SUBLANE))                # never exceed the (8-rounded) batch
    fits = usable > 0 and tile_bytes(tb) <= usable
    return tb, fits


def _mlp_forward_fused(x, prepared, output_dim, act_name, act_dtype, vmem_budget, tb):
    batch, input_dim = x.shape
    hidden_pad = prepared["w1"].shape[1]
    out_pad = prepared["w3"].shape[1]
    grid = (pl.cdiv(batch, tb),)

    w_bytes = sum(int(v.size) * v.dtype.itemsize for v in prepared.values())
    flops = 2 * batch * (input_dim * hidden_pad + hidden_pad * hidden_pad
                         + hidden_pad * out_pad)
    cost = pl.CostEstimate(
        flops=flops,
        transcendentals=2 * batch * hidden_pad,
        bytes_accessed=int(x.size) * x.dtype.itemsize + w_bytes + batch * out_pad * 4)

    def call(single_buffer_weights):
        def resident(arr):
            idx = lambda i: (0,) * arr.ndim
            if single_buffer_weights:
                # Constant blocks: one VMEM buffer instead of the default double buffer.
                return pl.BlockSpec(arr.shape, idx, pipeline_mode=pl.Buffered(1))
            return pl.BlockSpec(arr.shape, idx)

        return pl.pallas_call(
            functools.partial(_mlp_kernel, act_name=act_name, act_dtype=act_dtype),
            out_shape=jax.ShapeDtypeStruct((batch, out_pad), jnp.float32),
            grid=grid,
            in_specs=[
                pl.BlockSpec((tb, input_dim), lambda i: (i, 0)),   # streamed activation tile
                resident(prepared["w1"]), resident(prepared["b1"]),
                resident(prepared["w2"]), resident(prepared["b2"]),
                resident(prepared["w3"]), resident(prepared["b3"]),
            ],
            out_specs=pl.BlockSpec((tb, out_pad), lambda i: (i, 0)),  # lane-dense stores
            compiler_params=pltpu.CompilerParams(
                dimension_semantics=("parallel",),     # v7x: split the batch across both TCs
                vmem_limit_bytes=vmem_budget),
            cost_estimate=cost,
        )(x, prepared["w1"], prepared["b1"], prepared["w2"], prepared["b2"],
          prepared["w3"], prepared["b3"])

    try:
        out = call(True)
    except Exception:
        # pipeline_mode/Buffered not available on this jax version -> default buffering.
        out = call(False)
    return out[:, :output_dim]


def _mlp_forward_layered(x, prepared, output_dim, act_name, act_dtype, vmem_budget):
    """Fallback when the three weights don't fit VMEM-resident: per-layer
    pallas_calls tiled over (batch, out-features)."""
    # TODO(synk): the reduction (K) dim is not tiled; a single (K, tn) weight block
    # must still fit in VMEM.
    batch = x.shape[0]

    def layer(h, w, b, act):
        K, N = w.shape
        itemsize = np.dtype(w.dtype).itemsize
        pack = 16 if itemsize == 2 else 8
        tn = min(N, 1024)
        while tn > _LANE and 2 * K * tn * itemsize > vmem_budget // 4:
            tn = max(_LANE, ((tn // 2) // _LANE) * _LANE)
        tb = min(_round_up(batch, pack), 256, _round_up(batch, _SUBLANE))
        grid = (pl.cdiv(batch, tb), pl.cdiv(N, tn))
        return pl.pallas_call(
            functools.partial(_layer_kernel, act_name=act, act_dtype=act_dtype),
            out_shape=jax.ShapeDtypeStruct((batch, N), jnp.float32),
            grid=grid,
            in_specs=[
                pl.BlockSpec((tb, K), lambda i, j: (i, 0)),
                pl.BlockSpec((K, tn), lambda i, j: (0, j)),
                pl.BlockSpec((1, tn), lambda i, j: (0, j)),
            ],
            out_specs=pl.BlockSpec((tb, tn), lambda i, j: (i, j)),
            compiler_params=pltpu.CompilerParams(
                dimension_semantics=("parallel", "parallel"),
                vmem_limit_bytes=vmem_budget),
        )(h, w, b)

    h = layer(x, prepared["w1"], prepared["b1"], act_name)
    h = layer(h, prepared["w2"], prepared["b2"], act_name)
    out = layer(h, prepared["w3"], prepared["b3"], None)
    return out[:, :output_dim]


def mlp_forward(x, prepared, output_dim, compute_dtype, nonlinearity="tanh",
                act_dtype=None, block_batch=1024):
    """x: (batch, input_dim) float32. Returns (batch, output_dim) float32."""
    if act_dtype is None:
        act_dtype = (jnp.float32 if np.dtype(compute_dtype) == np.dtype(jnp.float32)
                     else _act_dtype())
    batch, input_dim = x.shape
    hidden_pad = prepared["w1"].shape[1]
    out_pad = prepared["w3"].shape[1]
    vmem_budget = _vmem_limit_bytes()
    w_bytes = sum(int(v.size) * v.dtype.itemsize for v in prepared.values())

    tb, fits = _choose_batch_tile(batch, input_dim, hidden_pad, out_pad,
                                  compute_dtype, vmem_budget, w_bytes, block_batch)
    if not fits:
        return _mlp_forward_layered(x, prepared, output_dim, nonlinearity,
                                    act_dtype, vmem_budget)
    return _mlp_forward_fused(x, prepared, output_dim, nonlinearity, act_dtype,
                              vmem_budget, tb)


# ---------------------------------------------------------------------------
if __name__ == "__main__":
    key = jax.random.PRNGKey(0)
    kx, kp = jax.random.split(key)

    batch, input_dim, hidden_dim, output_dim = 8, 16, 32, 8
    x = jax.random.normal(kx, (batch, input_dim), dtype=jnp.float32)
    params = init_mlp_params(kp, input_dim, hidden_dim, output_dim, bias_bool=True)
    prepared, out_dim, cdt = prepare_mlp_params(params)
    adt = jnp.float32 if np.dtype(cdt) == np.dtype(jnp.float32) else _act_dtype()

    out = mlp_forward(x, prepared, out_dim, cdt, nonlinearity="tanh", act_dtype=adt)
    out = jax.block_until_ready(out)

    # pure-JAX f32 reference (torch.nn.Linear semantics)
    h = jnp.tanh(x @ params["w1"] + params["b1"])
    h = jnp.tanh(h @ params["w2"] + params["b2"])
    ref = h @ params["w3"] + params["b3"]

    tol = 1e-5 if np.dtype(cdt) == np.dtype(jnp.float32) else 5e-2  # bf16 operands on v5e+
    assert out.shape == (batch, output_dim)
    assert jnp.allclose(out, ref, atol=tol, rtol=tol), float(jnp.max(jnp.abs(out - ref)))

    # Exercise the large-weight fallback path too (same numerics expected).
    out2 = _mlp_forward_layered(x, prepared, out_dim, "tanh", adt, _vmem_limit_bytes())
    out2 = jax.block_until_ready(out2)
    assert out2.shape == (batch, output_dim)
    assert jnp.allclose(out2, ref, atol=tol, rtol=tol), float(jnp.max(jnp.abs(out2 - ref)))

    print("KERNEL_OK")
</pallas_src>

<mosaic_0001>
module attributes {stable_mosaic.version = 11 : i64} {
  func.func @_mlp_kernel(%arg0: i32, %arg1: memref<8x16xf32, #tpu.memory_space<vmem>>, %arg2: memref<16x128xbf16, #tpu.memory_space<vmem>>, %arg3: memref<1x128xf32, #tpu.memory_space<vmem>>, %arg4: memref<128x128xbf16, #tpu.memory_space<vmem>>, %arg5: memref<1x128xf32, #tpu.memory_space<vmem>>, %arg6: memref<128x128xbf16, #tpu.memory_space<vmem>>, %arg7: memref<1x128xf32, #tpu.memory_space<vmem>>, %arg8: memref<8x128xf32, #tpu.memory_space<vmem>>) attributes {dimension_semantics = [#tpu.dimension_semantics<parallel>], iteration_bounds = array<i64: 1>, scalar_prefetch = 0 : i64, scratch_operands = 0 : i64, tpu.core_type = #tpu.core_type<tc>, window_params = [{transform_indices = @transform_0, window_bounds = array<i64: 8, 16>}, {pipeline_mode = #tpu.pipeline_mode<synchronous>, transform_indices = @transform_1, window_bounds = array<i64: 16, 128>}, {pipeline_mode = #tpu.pipeline_mode<synchronous>, transform_indices = @transform_2, window_bounds = array<i64: 1, 128>}, {pipeline_mode = #tpu.pipeline_mode<synchronous>, transform_indices = @transform_3, window_bounds = array<i64: 128, 128>}, {pipeline_mode = #tpu.pipeline_mode<synchronous>, transform_indices = @transform_4, window_bounds = array<i64: 1, 128>}, {pipeline_mode = #tpu.pipeline_mode<synchronous>, transform_indices = @transform_5, window_bounds = array<i64: 128, 128>}, {pipeline_mode = #tpu.pipeline_mode<synchronous>, transform_indices = @transform_6, window_bounds = array<i64: 1, 128>}, {transform_indices = @transform_7, window_bounds = array<i64: 8, 128>}]} {
    %c0 = arith.constant 0 : index
    %c0_0 = arith.constant 0 : index
    %0 = vector.load %arg1[%c0, %c0_0] : memref<8x16xf32, #tpu.memory_space<vmem>>, vector<8x16xf32>
    %1 = arith.truncf %0 : vector<8x16xf32> to vector<8x16xbf16>
    %c0_1 = arith.constant 0 : index
    %c0_2 = arith.constant 0 : index
    %2 = vector.load %arg2[%c0_1, %c0_2] : memref<16x128xbf16, #tpu.memory_space<vmem>>, vector<16x128xbf16>
    %cst = arith.constant dense<0.000000e+00> : vector<8x128xf32>
    %3 = tpu.matmul %1, %2, %cst {dimension_numbers = #tpu.dot_dimension_numbers<[1], [0], [0], [1], [0, 0, 1, 1], [], []>} : vector<8x16xbf16>, vector<16x128xbf16>, vector<8x128xf32> -> vector<8x128xf32>
    %c0_3 = arith.constant 0 : index
    %c0_4 = arith.constant 0 : index
    %4 = vector.load %arg3[%c0_3, %c0_4] : memref<1x128xf32, #tpu.memory_space<vmem>>, vector<1x128xf32>
    %5 = vector.broadcast %4 : vector<1x128xf32> to vector<8x128xf32>
    %6 = arith.addf %3, %5 : vector<8x128xf32>
    %7 = math.tanh %6 : vector<8x128xf32>
    %8 = arith.truncf %7 : vector<8x128xf32> to vector<8x128xbf16>
    %c0_5 = arith.constant 0 : index
    %c0_6 = arith.constant 0 : index
    %9 = vector.load %arg4[%c0_5, %c0_6] : memref<128x128xbf16, #tpu.memory_space<vmem>>, vector<128x128xbf16>
    %cst_7 = arith.constant dense<0.000000e+00> : vector<8x128xf32>
    %10 = tpu.matmul %8, %9, %cst_7 {dimension_numbers = #tpu.dot_dimension_numbers<[1], [0], [0], [1], [0, 0, 1, 1], [], []>} : vector<8x128xbf16>, vector<128x128xbf16>, vector<8x128xf32> -> vector<8x128xf32>
    %c0_8 = arith.constant 0 : index
    %c0_9 = arith.constant 0 : index
    %11 = vector.load %arg5[%c0_8, %c0_9] : memref<1x128xf32, #tpu.memory_space<vmem>>, vector<1x128xf32>
    %12 = vector.broadcast %11 : vector<1x128xf32> to vector<8x128xf32>
    %13 = arith.addf %10, %12 : vector<8x128xf32>
    %14 = math.tanh %13 : vector<8x128xf32>
    %15 = arith.truncf %14 : vector<8x128xf32> to vector<8x128xbf16>
    %c0_10 = arith.constant 0 : index
    %c0_11 = arith.constant 0 : index
    %16 = vector.load %arg6[%c0_10, %c0_11] : memref<128x128xbf16, #tpu.memory_space<vmem>>, vector<128x128xbf16>
    %cst_12 = arith.constant dense<0.000000e+00> : vector<8x128xf32>
    %17 = tpu.matmul %15, %16, %cst_12 {dimension_numbers = #tpu.dot_dimension_numbers<[1], [0], [0], [1], [0, 0, 1, 1], [], []>} : vector<8x128xbf16>, vector<128x128xbf16>, vector<8x128xf32> -> vector<8x128xf32>
    %c0_13 = arith.constant 0 : index
    %c0_14 = arith.constant 0 : index
    %18 = vector.load %arg7[%c0_13, %c0_14] : memref<1x128xf32, #tpu.memory_space<vmem>>, vector<1x128xf32>
    %19 = vector.broadcast %18 : vector<1x128xf32> to vector<8x128xf32>
    %20 = arith.addf %17, %19 : vector<8x128xf32>
    %c0_15 = arith.constant 0 : index
    %c0_16 = arith.constant 0 : index
    %21 = vector.load %arg8[%c0_15, %c0_16] : memref<8x128xf32, #tpu.memory_space<vmem>>, vector<8x128xf32>
    tpu.vector_store %arg8[%c0_15, %c0_16], %20 {strides = array<i32>} : memref<8x128xf32, #tpu.memory_space<vmem>>, vector<8x128xf32>,
    return
  }
  func.func @transform_0(%arg0: i32) -> (i32, i32) {
    %c0_i32 = arith.constant 0 : i32
    %c0_i32_0 = arith.constant 0 : i32
    return %arg0, %c0_i32 : i32, i32
  }
  func.func @transform_1(%arg0: i32) -> (i32, i32) {
    %c0_i32 = arith.constant 0 : i32
    %c0_i32_0 = arith.constant 0 : i32
    %c0_i32_1 = arith.constant 0 : i32
    return %c0_i32, %c0_i32_0 : i32, i32
  }
  func.func @transform_2(%arg0: i32) -> (i32, i32) {
    %c0_i32 = arith.constant 0 : i32
    %c0_i32_0 = arith.constant 0 : i32
    %c0_i32_1 = arith.constant 0 : i32
    return %c0_i32, %c0_i32_0 : i32, i32
  }
  func.func @transform_3(%arg0: i32) -> (i32, i32) {
    %c0_i32 = arith.constant 0 : i32
    %c0_i32_0 = arith.constant 0 : i32
    %c0_i32_1 = arith.constant 0 : i32
    return %c0_i32, %c0_i32_0 : i32, i32
  }
  func.func @transform_4(%arg0: i32) -> (i32, i32) {
    %c0_i32 = arith.constant 0 : i32
    %c0_i32_0 = arith.constant 0 : i32
    %c0_i32_1 = arith.constant 0 : i32
    return %c0_i32, %c0_i32_0 : i32, i32
  }
  func.func @transform_5(%arg0: i32) -> (i32, i32) {
    %c0_i32 = arith.constant 0 : i32
    %c0_i32_0 = arith.constant 0 : i32
    %c0_i32_1 = arith.constant 0 : i32
    return %c0_i32, %c0_i32_0 : i32, i32
  }
  func.func @transform_6(%arg0: i32) -> (i32, i32) {
    %c0_i32 = arith.constant 0 : i32
    %c0_i32_0 = arith.constant 0 : i32
    %c0_i32_1 = arith.constant 0 : i32
    return %c0_i32, %c0_i32_0 : i32, i32
  }
  func.func @transform_7(%arg0: i32) -> (i32, i32) {
    %c0_i32 = arith.constant 0 : i32
    %c0_i32_0 = arith.constant 0 : i32
    return %arg0, %c0_i32 : i32, i32
  }
}

module attributes {stable_mosaic.version = 11 : i64} {
  func.func @_mlp_kernel(%arg0: i32, %arg1: memref<8x16xf32, #tpu.memory_space<vmem>>, %arg2: memref<16x128xbf16, #tpu.memory_space<vmem>>, %arg3: memref<1x128xf32, #tpu.memory_space<vmem>>, %arg4: memref<128x128xbf16, #tpu.memory_space<vmem>>, %arg5: memref<1x128xf32, #tpu.memory_space<vmem>>, %arg6: memref<128x128xbf16, #tpu.memory_space<vmem>>, %arg7: memref<1x128xf32, #tpu.memory_space<vmem>>, %arg8: memref<8x128xf32, #tpu.memory_space<vmem>>) attributes {dimension_semantics = [#tpu.dimension_semantics<parallel>], iteration_bounds = array<i64: 1>, scalar_prefetch = 0 : i64, scratch_operands = 0 : i64, tpu.core_type = #tpu.core_type<tc>, window_params = [{transform_indices = @transform_0, window_bounds = array<i64: 8, 16>}, {pipeline_mode = #tpu.pipeline_mode<synchronous>, transform_indices = @transform_1, window_bounds = array<i64: 16, 128>}, {pipeline_mode = #tpu.pipeline_mode<synchronous>, transform_indices = @transform_2, window_bounds = array<i64: 1, 128>}, {pipeline_mode = #tpu.pipeline_mode<synchronous>, transform_indices = @transform_3, window_bounds = array<i64: 128, 128>}, {pipeline_mode = #tpu.pipeline_mode<synchronous>, transform_indices = @transform_4, window_bounds = array<i64: 1, 128>}, {pipeline_mode = #tpu.pipeline_mode<synchronous>, transform_indices = @transform_5, window_bounds = array<i64: 128, 128>}, {pipeline_mode = #tpu.pipeline_mode<synchronous>, transform_indices = @transform_6, window_bounds = array<i64: 1, 128>}, {transform_indices = @transform_7, window_bounds = array<i64: 8, 128>}]} {
    %c0 = arith.constant 0 : index
    %c0_0 = arith.constant 0 : index
    %0 = vector.load %arg1[%c0, %c0_0] : memref<8x16xf32, #tpu.memory_space<vmem>>, vector<8x16xf32>
    %1 = arith.truncf %0 : vector<8x16xf32> to vector<8x16xbf16>
    %c0_1 = arith.constant 0 : index
    %c0_2 = arith.constant 0 : index
    %2 = vector.load %arg2[%c0_1, %c0_2] : memref<16x128xbf16, #tpu.memory_space<vmem>>, vector<16x128xbf16>
    %cst = arith.constant dense<0.000000e+00> : vector<8x128xf32>
    %3 = tpu.matmul %1, %2, %cst {dimension_numbers = #tpu.dot_dimension_numbers<[1], [0], [0], [1], [0, 0, 1, 1], [], []>} : vector<8x16xbf16>, vector<16x128xbf16>, vector<8x128xf32> -> vector<8x128xf32>
    %c0_3 = arith.constant 0 : index
    %c0_4 = arith.constant 0 : index
    %4 = vector.load %arg3[%c0_3, %c0_4] : memref<1x128xf32, #tpu.memory_space<vmem>>, vector<1x128xf32>
    %5 = vector.broadcast %4 : vector<1x128xf32> to vector<8x128xf32>
    %6 = arith.addf %3, %5 : vector<8x128xf32>
    %7 = math.tanh %6 : vector<8x128xf32>
    %8 = arith.truncf %7 : vector<8x128xf32> to vector<8x128xbf16>
    %c0_5 = arith.constant 0 : index
    %c0_6 = arith.constant 0 : index
    %9 = vector.load %arg4[%c0_5, %c0_6] : memref<128x128xbf16, #tpu.memory_space<vmem>>, vector<128x128xbf16>
    %cst_7 = arith.constant dense<0.000000e+00> : vector<8x128xf32>
    %10 = tpu.matmul %8, %9, %cst_7 {dimension_numbers = #tpu.dot_dimension_numbers<[1], [0], [0], [1], [0, 0, 1, 1], [], []>} : vector<8x128xbf16>, vector<128x128xbf16>, vector<8x128xf32> -> vector<8x128xf32>
    %c0_8 = arith.constant 0 : index
    %c0_9 = arith.constant 0 : index
    %11 = vector.load %arg5[%c0_8, %c0_9] : memref<1x128xf32, #tpu.memory_space<vmem>>, vector<1x128xf32>
    %12 = vector.broadcast %11 : vector<1x128xf32> to vector<8x128xf32>
    %13 = arith.addf %10, %12 : vector<8x128xf32>
    %14 = math.tanh %13 : vector<8x128xf32>
    %15 = arith.truncf %14 : vector<8x128xf32> to vector<8x128xbf16>
    %c0_10 = arith.constant 0 : index
    %c0_11 = arith.constant 0 : index
    %16 = vector.load %arg6[%c0_10, %c0_11] : memref<128x128xbf16, #tpu.memory_space<vmem>>, vector<128x128xbf16>
    %cst_12 = arith.constant dense<0.000000e+00> : vector<8x128xf32>
    %17 = tpu.matmul %15, %16, %cst_12 {dimension_numbers = #tpu.dot_dimension_numbers<[1], [0], [0], [1], [0, 0, 1, 1], [], []>} : vector<8x128xbf16>, vector<128x128xbf16>, vector<8x128xf32> -> vector<8x128xf32>
    %c0_13 = arith.constant 0 : index
    %c0_14 = arith.constant 0 : index
    %18 = vector.load %arg7[%c0_13, %c0_14] : memref<1x128xf32, #tpu.memory_space<vmem>>, vector<1x128xf32>
    %19 = vector.broadcast %18 : vector<1x128xf32> to vector<8x128xf32>
    %20 = arith.addf %17, %19 : vector<8x128xf32>
    %c0_15 = arith.constant 0 : index
    %c0_16 = arith.constant 0 : index
    %21 = vector.load %arg8[%c0_15, %c0_16] : memref<8x128xf32, #tpu.memory_space<vmem>>, vector<8x128xf32>
    tpu.vector_store %arg8[%c0_15, %c0_16], %20 {strides = array<i32>} : memref<8x128xf32, #tpu.memory_space<vmem>>, vector<8x128xf32>,
    return
  }
  func.func @transform_0(%arg0: i32) -> (i32, i32) {
    %c0_i32 = arith.constant 0 : i32
    %c0_i32_0 = arith.constant 0 : i32
    return %arg0, %c0_i32 : i32, i32
  }
  func.func @transform_1(%arg0: i32) -> (i32, i32) {
    %c0_i32 = arith.constant 0 : i32
    %c0_i32_0 = arith.constant 0 : i32
    %c0_i32_1 = arith.constant 0 : i32
    return %c0_i32, %c0_i32_0 : i32, i32
  }
  func.func @transform_2(%arg0: i32) -> (i32, i32) {
    %c0_i32 = arith.constant 0 : i32
    %c0_i32_0 = arith.constant 0 : i32
    %c0_i32_1 = arith.constant 0 : i32
    return %c0_i32, %c0_i32_0 : i32, i32
  }
  func.func @transform_3(%arg0: i32) -> (i32, i32) {
    %c0_i32 = arith.constant 0 : i32
    %c0_i32_0 = arith.constant 0 : i32
    %c0_i32_1 = arith.constant 0 : i32
    return %c0_i32, %c0_i32_0 : i32, i32
  }
  func.func @transform_4(%arg0: i32) -> (i32, i32) {
    %c0_i32 = arith.constant 0 : i32
    %c0_i32_0 = arith.constant 0 : i32
    %c0_i32_1 = arith.constant 0 : i32
    return %c0_i32, %c0_i32_0 : i32, i32
  }
  func.func @transform_5(%arg0: i32) -> (i32, i32) {
    %c0_i32 = arith.constant 0 : i32
    %c0_i32_0 = arith.constant 0 : i32
    %c0_i32_1 = arith.constant 0 : i32
    return %c0_i32, %c0_i32_0 : i32, i32
  }
  func.func @transform_6(%arg0: i32) -> (i32, i32) {
    %c0_i32 = arith.constant 0 : i32
    %c0_i32_0 = arith.constant 0 : i32
    %c0_i32_1 = arith.constant 0 : i32
    return %c0_i32, %c0_i32_0 : i32, i32
  }
  func.func @transform_7(%arg0: i32) -> (i32, i32) {
    %c0_i32 = arith.constant 0 : i32
    %c0_i32_0 = arith.constant 0 : i32
    return %arg0, %c0_i32 : i32, i32
  }
}

</mosaic_0001>

<llo_original>
// kernel: tpu_custom_call.1
$region0: #{tpu_custom_call.1}
  #allocation0 [shape = 'u32[]', space=smem, size = 0x4, offset = 0x4, fixed_abs, tag = 'smem constant byte address 0x4 - core index']
  #allocation1 [shape = 'u32[144,128]{1,0:T(1,128)}', space=vmem, size = 0x12000, scoped, tag = 'internal scratch']
  %s0 = inlined_call_operand.hbm [shape: f32[8,16], index: 0, kind: input, shape index: {}]
  %s1 = inlined_call_operand.hbm [shape: bf16[16,128], index: 1, kind: input, shape index: {}]
  %s2 = inlined_call_operand.hbm [shape: f32[1,128], index: 2, kind: input, shape index: {}]
  %s3 = inlined_call_operand.hbm [shape: bf16[128,128], index: 3, kind: input, shape index: {}]
  %s4 = inlined_call_operand.hbm [shape: f32[1,128], index: 4, kind: input, shape index: {}]
  %s5 = inlined_call_operand.hbm [shape: bf16[128,128], index: 5, kind: input, shape index: {}]
  %s6 = inlined_call_operand.hbm [shape: f32[1,128], index: 6, kind: input, shape index: {}]
  %s7 = inlined_call_operand.hbm [shape: f32[8,128], index: 7, kind: output, shape index: {}]
  %s8 = sld [smem:[#allocation0]]
  $region66: #{tpu_custom_call.1} parent=0
    _
  %s10 = ssub.s32 1, %s8
  %s11 = scalar_select 0, %s10, %s8
  $region1: #{tpu_custom_call.1} parent=0
    #allocation2 [shape = 'u8[4096]{0}', space=vmem, size = 0x1000, scoped, tag = 'input window, operand 0, single buffered']
    #allocation3 [shape = 's32[1]{0}', space=sflag, size = 0x4, scoped, tag = 'scoped memory for tpu_custom_call.1']
    #allocation4 [shape = 's32[1]{0}', space=sflag, size = 0x4, scoped, tag = 'scoped memory for tpu_custom_call.1']
    #allocation5 [shape = 'u8[4096]{0}', space=vmem, size = 0x1000, scoped, tag = 'input window, operand 1, single buffered']
    #allocation6 [shape = 's32[1]{0}', space=sflag, size = 0x4, scoped, tag = 'scoped memory for tpu_custom_call.1']
    #allocation7 [shape = 'u8[512]{0}', space=vmem, size = 0x400, scoped, tag = 'input window, operand 2, single buffered']
    #allocation8 [shape = 'u8[32768]{0}', space=vmem, size = 0x8000, scoped, tag = 'input window, operand 3, single buffered']
    #allocation9 [shape = 's32[1]{0}', space=sflag, size = 0x4, scoped, tag = 'scoped memory for tpu_custom_call.1']
    #allocation10 [shape = 'u8[512]{0}', space=vmem, size = 0x400, scoped, tag = 'input window, operand 4, single buffered']
    #allocation11 [shape = 'u8[32768]{0}', space=vmem, size = 0x8000, scoped, tag = 'input window, operand 5, single buffered']
    #allocation12 [shape = 's32[1]{0}', space=sflag, size = 0x4, scoped, tag = 'scoped memory for tpu_custom_call.1']
    #allocation13 [shape = 'u8[512]{0}', space=vmem, size = 0x400, scoped, tag = 'input window, operand 6, single buffered']
    #allocation14 [shape = 'u8[4096]{0}', space=vmem, size = 0x1000, scoped, tag = 'output window, operand 0, single buffered']
    %12 = vsyncpa [#allocation3], 0
    %13 = vsyncpa [#allocation6], 0
    %14 = vsyncpa [#allocation9], 0
    %15 = vsyncpa [#allocation12], 0
    %16 = vsyncpa [#allocation4], 0
    // Predicated region
    $region2: #{tpu_custom_call.1} parent=1 // pred_check
      _
    $region3: #{tpu_custom_call.1} parent=1 // pred_check_branch
      %18 = sbr.rel (0) target = $region5
    $region4: #{tpu_custom_call.1} parent=1 // pred_region
      %s20 = ssub.s32 128, 128
      %21 = vsyncadd [#allocation3], %s20
      %s23 = sshll.u32 [#allocation2], 4
      %s24 = int_to_ptr.vmem [resolvable:$true] %s23
      %26 = dma.hbm_to_vmem [thread:$0]  %s0, 128, %s24, [#allocation3]
    $region5: #{tpu_custom_call.1} parent=1 // pred_fallthru
      _
    // Predicated region
    $region6: #{tpu_custom_call.1} parent=1 // pred_check
      _
    $region7: #{tpu_custom_call.1} parent=1 // pred_check_branch
      %28 = sbr.rel (0) target = $region9
    $region8: #{tpu_custom_call.1} parent=1 // pred_region
      %s30 = ssub.s32 128, 128
      %31 = vsyncadd [#allocation6], %s30
      %s32 = sshll.u32 [#allocation5], 4
      %s33 = int_to_ptr.vmem [resolvable:$true] %s32
      %38 = dma.hbm_to_vmem [thread:$0]  %s1, 128, %s33, [#allocation6], 64, 64, 4
    $region9: #{tpu_custom_call.1} parent=1 // pred_fallthru
      _
    // Predicated region
    $region10: #{tpu_custom_call.1} parent=1 // pred_check
      _
    $region11: #{tpu_custom_call.1} parent=1 // pred_check_branch
      %40 = sbr.rel (0) target = $region13
    $region12: #{tpu_custom_call.1} parent=1 // pred_region
      %s42 = ssub.s32 16, 16
      %43 = vsyncadd [#allocation6], %s42
      %s45 = sshll.u32 [#allocation7], 4
      %s46 = int_to_ptr.vmem [resolvable:$true] %s45
      %48 = dma.hbm_to_vmem [thread:$0]  %s2, 16, %s46, [#allocation6]
    $region13: #{tpu_custom_call.1} parent=1 // pred_fallthru
      _
    // Predicated region
    $region14: #{tpu_custom_call.1} parent=1 // pred_check
      _
    $region15: #{tpu_custom_call.1} parent=1 // pred_check_branch
      %50 = sbr.rel (0) target = $region17
    $region16: #{tpu_custom_call.1} parent=1 // pred_region
      %s52 = ssub.s32 1024, 1024
      %53 = vsyncadd [#allocation9], %s52
      %s54 = sshll.u32 [#allocation8], 4
      %s55 = int_to_ptr.vmem [resolvable:$true] %s54
      %60 = dma.hbm_to_vmem [thread:$0]  %s3, 1024, %s55, [#allocation9], 64, 64, 4
    $region17: #{tpu_custom_call.1} parent=1 // pred_fallthru
      _
    // Predicated region
    $region18: #{tpu_custom_call.1} parent=1 // pred_check
      _
    $region19: #{tpu_custom_call.1} parent=1 // pred_check_branch
      %62 = sbr.rel (0) target = $region21
    $region20: #{tpu_custom_call.1} parent=1 // pred_region
      %s64 = ssub.s32 16, 16
      %65 = vsyncadd [#allocation9], %s64
      %s67 = sshll.u32 [#allocation10], 4
      %s68 = int_to_ptr.vmem [resolvable:$true] %s67
      %70 = dma.hbm_to_vmem [thread:$0]  %s4, 16, %s68, [#allocation9]
    $region21: #{tpu_custom_call.1} parent=1 // pred_fallthru
      _
    // Predicated region
    $region22: #{tpu_custom_call.1} parent=1 // pred_check
      _
    $region23: #{tpu_custom_call.1} parent=1 // pred_check_branch
      %72 = sbr.rel (0) target = $region25
    $region24: #{tpu_custom_call.1} parent=1 // pred_region
      %s74 = ssub.s32 1024, 1024
      %75 = vsyncadd [#allocation12], %s74
      %s76 = sshll.u32 [#allocation11], 4
      %s77 = int_to_ptr.vmem [resolvable:$true] %s76
      %82 = dma.hbm_to_vmem [thread:$0]  %s5, 1024, %s77, [#allocation12], 64, 64, 4
    $region25: #{tpu_custom_call.1} parent=1 // pred_fallthru
      _
    // Predicated region
    $region26: #{tpu_custom_call.1} parent=1 // pred_check
      _
    $region27: #{tpu_custom_call.1} parent=1 // pred_check_branch
      %84 = sbr.rel (0) target = $region29
    $region28: #{tpu_custom_call.1} parent=1 // pred_region
      %s86 = ssub.s32 16, 16
      %87 = vsyncadd [#allocation12], %s86
      %s89 = sshll.u32 [#allocation13], 4
      %s90 = int_to_ptr.vmem [resolvable:$true] %s89
      %92 = dma.hbm_to_vmem [thread:$0]  %s6, 16, %s90, [#allocation12]
    $region29: #{tpu_custom_call.1} parent=1 // pred_fallthru
      _
    // Predicated region
    $region30: #{tpu_custom_call.1} parent=1 // pred_check
      _
    $region31: #{tpu_custom_call.1} parent=1 // pred_check_branch
      %94 = sbr.rel (0) target = $region33
    $region32: #{tpu_custom_call.1} parent=1 // pred_region
      %95 = dma.done [#allocation3], 128
    $region33: #{tpu_custom_call.1} parent=1 // pred_fallthru
      _
    // Predicated region
    $region34: #{tpu_custom_call.1} parent=1 // pred_check
      _
    $region35: #{tpu_custom_call.1} parent=1 // pred_check_branch
      %97 = sbr.rel (0) target = $region37
    $region36: #{tpu_custom_call.1} parent=1 // pred_region
      %98 = dma.done [#allocation6], 128
    $region37: #{tpu_custom_call.1} parent=1 // pred_fallthru
      _
    // Predicated region
    $region38: #{tpu_custom_call.1} parent=1 // pred_check
      _
    $region39: #{tpu_custom_call.1} parent=1 // pred_check_branch
      %100 = sbr.rel (0) target = $region41
    $region40: #{tpu_custom_call.1} parent=1 // pred_region
      %101 = dma.done [#allocation6], 16
    $region41: #{tpu_custom_call.1} parent=1 // pred_fallthru
      _
    // Predicated region
    $region42: #{tpu_custom_call.1} parent=1 // pred_check
      _
    $region43: #{tpu_custom_call.1} parent=1 // pred_check_branch
      %103 = sbr.rel (0) target = $region45
    $region44: #{tpu_custom_call.1} parent=1 // pred_region
      %104 = dma.done [#allocation9], 1024
    $region45: #{tpu_custom_call.1} parent=1 // pred_fallthru
      _
    // Predicated region
    $region46: #{tpu_custom_call.1} parent=1 // pred_check
      _
    $region47: #{tpu_custom_call.1} parent=1 // pred_check_branch
      %106 = sbr.rel (0) target = $region49
    $region48: #{tpu_custom_call.1} parent=1 // pred_region
      %107 = dma.done [#allocation9], 16
    $region49: #{tpu_custom_call.1} parent=1 // pred_fallthru
      _
    // Predicated region
    $region50: #{tpu_custom_call.1} parent=1 // pred_check
      _
    $region51: #{tpu_custom_call.1} parent=1 // pred_check_branch
      %109 = sbr.rel (0) target = $region53
    $region52: #{tpu_custom_call.1} parent=1 // pred_region
      %110 = dma.done [#allocation12], 1024
    $region53: #{tpu_custom_call.1} parent=1 // pred_fallthru
      _
    // Predicated region
    $region54: #{tpu_custom_call.1} parent=1 // pred_check
      _
    $region55: #{tpu_custom_call.1} parent=1 // pred_check_branch
      %112 = sbr.rel (0) target = $region57
    $region56: #{tpu_custom_call.1} parent=1 // pred_region
      %113 = dma.done [#allocation12], 16
    $region57: #{tpu_custom_call.1} parent=1 // pred_fallthru
      _
    %v115 = vld [vmem:[#allocation2] sm:$0xff]
    %v116 = vpack.c.bf16 %v115, %v115
    %v117 = vld [vmem:[#allocation5] sm:$0xf]
    %v118 = vld [vmem:[#allocation5 + $0x4] sm:$0xf]
    %v119 = vld [vmem:[#allocation7] sm:$0x1]
    %v121 = vlaneseq
    %v122 = vshrl.u32 %v121, 7
    %v123 = vsub.s32 0, %v122
    %v124 = vrot.slane %v119, %v123
    %v128 = vunpack.c.l.b16 %v117
    %v129 = vunpack.c.l.b16 %v118
    %v130 = vpack.c.b16 %v129, %v128
    %vm132 = vcmask 130048
    %v134 = vsel %vm132, %v116, 0
    %136 = vmatprep.subr.bf16.mxu0 0
    %137 = vmatpush1.bf16.msra.mxu0 %v130
    %138 = vmatprep.subr.bf16.mxu0 0
    %139 = vmatpush1.bf16.msra.mxu0 0
    %140 = vmatprep.subr.bf16.mxu0 0
    %141 = vmatpush1.bf16.msra.mxu0 0
    %142 = vmatprep.subr.bf16.mxu0 0
    %143 = vmatpush1.bf16.msra.mxu0 0
    %144 = vmatprep.subr.bf16.mxu0 0
    %145 = vmatpush1.bf16.msra.mxu0 0
    %146 = vmatprep.subr.bf16.mxu0 0
    %147 = vmatpush1.bf16.msra.mxu0 0
    %148 = vmatprep.subr.bf16.mxu0 0
    %149 = vmatpush1.bf16.msra.mxu0 0
    %150 = vmatprep.subr.bf16.mxu0 0
    %151 = vmatpush1.bf16.msra.mxu0 0
    %152 = vmatprep.subr.bf16.mxu0 0
    %153 = vmatpush1.bf16.msra.mxu0 0
    %154 = vmatprep.subr.bf16.mxu0 0
    %155 = vmatpush1.bf16.msra.mxu0 0
    %156 = vmatprep.subr.bf16.mxu0 0
    %157 = vmatpush1.bf16.msra.mxu0 0
    %158 = vmatprep.subr.bf16.mxu0 0
    %159 = vmatpush1.bf16.msra.mxu0 0
    %160 = vmatprep.subr.bf16.mxu0 0
    %161 = vmatpush1.bf16.msra.mxu0 0
    %162 = vmatprep.subr.bf16.mxu0 0
    %163 = vmatpush1.bf16.msra.mxu0 0
    %164 = vmatprep.subr.bf16.mxu0 0
    %165 = vmatpush1.bf16.msra.mxu0 0
    %166 = vmatprep.subr.bf16.mxu0 0
    %167 = vmatpush1.bf16.msra.mxu0 0
    %168 = vmatprep.mubr.bf16.mxu0 0
    %169 = vmatmul.mubr.bf16.gmra.mrb[0].mxu0 %v134
    %v170 = vpop.f32.mrb[0].mxu0
    %v171 = vadd.f32 %v124, %v170
    %v172 = vpop.f32.mrb[0].mxu0
    %v173 = vpop.f32.mrb[0].mxu0
    %v174 = vpop.f32.mrb[0].mxu0
    %175 = vdwg.mxu0
    %v176 = vtanh.pop %v171
    %v177 = vpack.c.bf16 %v176, %v176
    %v178 = vld [vmem:[#allocation8] sm:$0xf]
    %v179 = vld [vmem:[#allocation8 + $0x4] sm:$0xf]
    %v180 = vld [vmem:[#allocation8 + $0x8] sm:$0xf]
    %v181 = vld [vmem:[#allocation8 + $0xc] sm:$0xf]
    %v182 = vld [vmem:[#allocation8 + $0x10] sm:$0xf]
    %v183 = vld [vmem:[#allocation8 + $0x14] sm:$0xf]
    %v184 = vld [vmem:[#allocation8 + $0x18] sm:$0xf]
    %v185 = vld [vmem:[#allocation8 + $0x1c] sm:$0xf]
    %v186 = vld [vmem:[#allocation8 + $0x20] sm:$0xf]
    %v187 = vld [vmem:[#allocation8 + $0x24] sm:$0xf]
    %v188 = vld [vmem:[#allocation8 + $0x28] sm:$0xf]
    %v189 = vld [vmem:[#allocation8 + $0x2c] sm:$0xf]
    %v190 = vld [vmem:[#allocation8 + $0x30] sm:$0xf]
    %v191 = vld [vmem:[#allocation8 + $0x34] sm:$0xf]
    %v192 = vld [vmem:[#allocation8 + $0x38] sm:$0xf]
    %v193 = vld [vmem:[#allocation8 + $0x3c] sm:$0xf]
    %v194 = vld [vmem:[#allocation10] sm:$0x1]
    %v196 = vlaneseq
    %v197 = vshrl.u32 %v196, 7
    %v198 = vsub.s32 0, %v197
    %v199 = vrot.slane %v194, %v198
    %v217 = vunpack.c.l.b16 %v178
    %v218 = vunpack.c.l.b16 %v179
    %v219 = vunpack.c.l.b16 %v180
    %v220 = vunpack.c.l.b16 %v181
    %v221 = vunpack.c.l.b16 %v182
    %v222 = vunpack.c.l.b16 %v183
    %v223 = vunpack.c.l.b16 %v184
    %v224 = vunpack.c.l.b16 %v185
    %v225 = vunpack.c.l.b16 %v186
    %v226 = vunpack.c.l.b16 %v187
    %v227 = vunpack.c.l.b16 %v188
    %v228 = vunpack.c.l.b16 %v189
    %v229 = vunpack.c.l.b16 %v190
    %v230 = vunpack.c.l.b16 %v191
    %v231 = vunpack.c.l.b16 %v192
    %v232 = vunpack.c.l.b16 %v193
    %v233 = vpack.c.b16 %v218, %v217
    %v234 = vpack.c.b16 %v220, %v219
    %v235 = vpack.c.b16 %v222, %v221
    %v236 = vpack.c.b16 %v224, %v223
    %v237 = vpack.c.b16 %v226, %v225
    %v238 = vpack.c.b16 %v228, %v227
    %v239 = vpack.c.b16 %v230, %v229
    %v240 = vpack.c.b16 %v232, %v231
    %249 = vmatprep.subr.bf16.mxu0 0
    %250 = vmatpush1.bf16.msra.mxu0 %v233
    %251 = vmatprep.subr.bf16.mxu0 0
    %252 = vmatpush1.bf16.msra.mxu0 %v234
    %253 = vmatprep.subr.bf16.mxu0 0
    %254 = vmatpush1.bf16.msra.mxu0 %v235
    %255 = vmatprep.subr.bf16.mxu0 0
    %256 = vmatpush1.bf16.msra.mxu0 %v236
    %257 = vmatprep.subr.bf16.mxu0 0
    %258 = vmatpush1.bf16.msra.mxu0 %v237
    %259 = vmatprep.subr.bf16.mxu0 0
    %260 = vmatpush1.bf16.msra.mxu0 %v238
    %261 = vmatprep.subr.bf16.mxu0 0
    %262 = vmatpush1.bf16.msra.mxu0 %v239
    %263 = vmatprep.subr.bf16.mxu0 0
    %264 = vmatpush1.bf16.msra.mxu0 %v240
    %265 = vmatprep.subr.bf16.mxu0 0
    %266 = vmatpush1.bf16.msra.mxu0 0
    %267 = vmatprep.subr.bf16.mxu0 0
    %268 = vmatpush1.bf16.msra.mxu0 0
    %269 = vmatprep.subr.bf16.mxu0 0
    %270 = vmatpush1.bf16.msra.mxu0 0
    %271 = vmatprep.subr.bf16.mxu0 0
    %272 = vmatpush1.bf16.msra.mxu0 0
    %273 = vmatprep.subr.bf16.mxu0 0
    %274 = vmatpush1.bf16.msra.mxu0 0
    %275 = vmatprep.subr.bf16.mxu0 0
    %276 = vmatpush1.bf16.msra.mxu0 0
    %277 = vmatprep.subr.bf16.mxu0 0
    %278 = vmatpush1.bf16.msra.mxu0 0
    %279 = vmatprep.subr.bf16.mxu0 0
    %280 = vmatpush1.bf16.msra.mxu0 0
    %281 = vmatprep.mubr.bf16.mxu0 0
    %282 = vmatmul.mubr.bf16.gmra.mrb[0].mxu0 %v177
    %v283 = vpop.f32.mrb[0].mxu0
    %v284 = vadd.f32 %v199, %v283
    %v285 = vpop.f32.mrb[0].mxu0
    %v286 = vpop.f32.mrb[0].mxu0
    %v287 = vpop.f32.mrb[0].mxu0
    %288 = vdwg.mxu0
    %v289 = vtanh.pop %v284
    %v290 = vpack.c.bf16 %v289, %v289
    %v291 = vld [vmem:[#allocation11] sm:$0xf]
    %v292 = vld [vmem:[#allocation11 + $0x4] sm:$0xf]
    %v293 = vld [vmem:[#allocation11 + $0x8] sm:$0xf]
    %v294 = vld [vmem:[#allocation11 + $0xc] sm:$0xf]
    %v295 = vld [vmem:[#allocation11 + $0x10] sm:$0xf]
    %v296 = vld [vmem:[#allocation11 + $0x14] sm:$0xf]
    %v297 = vld [vmem:[#allocation11 + $0x18] sm:$0xf]
    %v298 = vld [vmem:[#allocation11 + $0x1c] sm:$0xf]
    %v299 = vld [vmem:[#allocation11 + $0x20] sm:$0xf]
    %v300 = vld [vmem:[#allocation11 + $0x24] sm:$0xf]
    %v301 = vld [vmem:[#allocation11 + $0x28] sm:$0xf]
    %v302 = vld [vmem:[#allocation11 + $0x2c] sm:$0xf]
    %v303 = vld [vmem:[#allocation11 + $0x30] sm:$0xf]
    %v304 = vld [vmem:[#allocation11 + $0x34] sm:$0xf]
    %v305 = vld [vmem:[#allocation11 + $0x38] sm:$0xf]
    %v306 = vld [vmem:[#allocation11 + $0x3c] sm:$0xf]
    %v307 = vld [vmem:[#allocation13] sm:$0x1]
    %v309 = vlaneseq
    %v310 = vshrl.u32 %v309, 7
    %v311 = vsub.s32 0, %v310
    %v312 = vrot.slane %v307, %v311
    %v330 = vunpack.c.l.b16 %v291
    %v331 = vunpack.c.l.b16 %v292
    %v332 = vunpack.c.l.b16 %v293
    %v333 = vunpack.c.l.b16 %v294
    %v334 = vunpack.c.l.b16 %v295
    %v335 = vunpack.c.l.b16 %v296
    %v336 = vunpack.c.l.b16 %v297
    %v337 = vunpack.c.l.b16 %v298
    %v338 = vunpack.c.l.b16 %v299
    %v339 = vunpack.c.l.b16 %v300
    %v340 = vunpack.c.l.b16 %v301
    %v341 = vunpack.c.l.b16 %v302
    %v342 = vunpack.c.l.b16 %v303
    %v343 = vunpack.c.l.b16 %v304
    %v344 = vunpack.c.l.b16 %v305
    %v345 = vunpack.c.l.b16 %v306
    %v346 = vpack.c.b16 %v331, %v330
    %v347 = vpack.c.b16 %v333, %v332
    %v348 = vpack.c.b16 %v335, %v334
    %v349 = vpack.c.b16 %v337, %v336
    %v350 = vpack.c.b16 %v339, %v338
    %v351 = vpack.c.b16 %v341, %v340
    %v352 = vpack.c.b16 %v343, %v342
    %v353 = vpack.c.b16 %v345, %v344
    %362 = vmatprep.subr.bf16.mxu0 0
    %363 = vmatpush1.bf16.msra.mxu0 %v346
    %364 = vmatprep.subr.bf16.mxu0 0
    %365 = vmatpush1.bf16.msra.mxu0 %v347
    %366 = vmatprep.subr.bf16.mxu0 0
    %367 = vmatpush1.bf16.msra.mxu0 %v348
    %368 = vmatprep.subr.bf16.mxu0 0
    %369 = vmatpush1.bf16.msra.mxu0 %v349
    %370 = vmatprep.subr.bf16.mxu0 0
    %371 = vmatpush1.bf16.msra.mxu0 %v350
    %372 = vmatprep.subr.bf16.mxu0 0
    %373 = vmatpush1.bf16.msra.mxu0 %v351
    %374 = vmatprep.subr.bf16.mxu0 0
    %375 = vmatpush1.bf16.msra.mxu0 %v352
    %376 = vmatprep.subr.bf16.mxu0 0
    %377 = vmatpush1.bf16.msra.mxu0 %v353
    %378 = vmatprep.subr.bf16.mxu0 0
    %379 = vmatpush1.bf16.msra.mxu0 0
    %380 = vmatprep.subr.bf16.mxu0 0
    %381 = vmatpush1.bf16.msra.mxu0 0
    %382 = vmatprep.subr.bf16.mxu0 0
    %383 = vmatpush1.bf16.msra.mxu0 0
    %384 = vmatprep.subr.bf16.mxu0 0
    %385 = vmatpush1.bf16.msra.mxu0 0
    %386 = vmatprep.subr.bf16.mxu0 0
    %387 = vmatpush1.bf16.msra.mxu0 0
    %388 = vmatprep.subr.bf16.mxu0 0
    %389 = vmatpush1.bf16.msra.mxu0 0
    %390 = vmatprep.subr.bf16.mxu0 0
    %391 = vmatpush1.bf16.msra.mxu0 0
    %392 = vmatprep.subr.bf16.mxu0 0
    %393 = vmatpush1.bf16.msra.mxu0 0
    %394 = vmatprep.mubr.bf16.mxu0 0
    %395 = vmatmul.mubr.bf16.gmra.mrb[0].mxu0 %v290
    %v396 = vpop.f32.mrb[0].mxu0
    %v397 = vadd.f32 %v312, %v396
    %v398 = vpop.f32.mrb[0].mxu0
    %v399 = vpop.f32.mrb[0].mxu0
    %v400 = vpop.f32.mrb[0].mxu0
    %401 = vdwg.mxu0
    %402 = vst [vmem:[#allocation14] sm:$0xff] %v397
    // Predicated region
    $region58: #{tpu_custom_call.1} parent=1 // pred_check
      _
    $region59: #{tpu_custom_call.1} parent=1 // pred_check_branch
      %404 = sbr.rel (0) target = $region61
    $region60: #{tpu_custom_call.1} parent=1 // pred_region
      %s406 = ssub.s32 128, 128
      %407 = vsyncadd [#allocation4], %s406
      %s409 = sshll.u32 [#allocation14], 4
      %s410 = int_to_ptr.vmem [resolvable:$true] %s409
      %412 = dma.vmem_to_hbm [thread:$0]  %s410, 128, %s7, [#allocation4]
    $region61: #{tpu_custom_call.1} parent=1 // pred_fallthru
      _
    // Predicated region
    $region62: #{tpu_custom_call.1} parent=1 // pred_check
      _
    $region63: #{tpu_custom_call.1} parent=1 // pred_check_branch
      %414 = sbr.rel (0) target = $region65
    $region64: #{tpu_custom_call.1} parent=1 // pred_region
      %415 = dma.done [#allocation4], 128
    $region65: #{tpu_custom_call.1} parent=1 // pred_fallthru
      _
    %416 = vsyncpa [#allocation3], 1
    %417 = vsyncpa [#allocation6], 1
    %418 = vsyncpa [#allocation9], 1
    %419 = vsyncpa [#allocation12], 1
    %420 = vsyncpa [#allocation4], 1

// kernel: tpu_custom_call.1
$region0: #{tpu_custom_call.1}
  #allocation0 [shape = 'u32[]', space=smem, size = 0x4, offset = 0x4, fixed_abs, tag = 'smem constant byte address 0x4 - core index']
  #allocation1 [shape = 'u32[144,128]{1,0:T(1,128)}', space=vmem, size = 0x12000, scoped, tag = 'internal scratch']
  %s0 = inlined_call_operand.hbm [shape: f32[8,16], index: 0, kind: input, shape index: {}]
  %s1 = inlined_call_operand.hbm [shape: bf16[16,128], index: 1, kind: input, shape index: {}]
  %s2 = inlined_call_operand.hbm [shape: f32[1,128], index: 2, kind: input, shape index: {}]
  %s3 = inlined_call_operand.hbm [shape: bf16[128,128], index: 3, kind: input, shape index: {}]
  %s4 = inlined_call_operand.hbm [shape: f32[1,128], index: 4, kind: input, shape index: {}]
  %s5 = inlined_call_operand.hbm [shape: bf16[128,128], index: 5, kind: input, shape index: {}]
  %s6 = inlined_call_operand.hbm [shape: f32[1,128], index: 6, kind: input, shape index: {}]
  %s7 = inlined_call_operand.hbm [shape: f32[8,128], index: 7, kind: output, shape index: {}]
  %s8 = sld [smem:[#allocation0]]
  $region66: #{tpu_custom_call.1} parent=0
    _
  %s10 = ssub.s32 1, %s8
  %s11 = scalar_select 0, %s10, %s8
  $region1: #{tpu_custom_call.1} parent=0
    #allocation2 [shape = 'u8[4096]{0}', space=vmem, size = 0x1000, scoped, tag = 'input window, operand 0, single buffered']
    #allocation3 [shape = 's32[1]{0}', space=sflag, size = 0x4, scoped, tag = 'scoped memory for tpu_custom_call.1']
    #allocation4 [shape = 's32[1]{0}', space=sflag, size = 0x4, scoped, tag = 'scoped memory for tpu_custom_call.1']
    #allocation5 [shape = 'u8[4096]{0}', space=vmem, size = 0x1000, scoped, tag = 'input window, operand 1, single buffered']
    #allocation6 [shape = 's32[1]{0}', space=sflag, size = 0x4, scoped, tag = 'scoped memory for tpu_custom_call.1']
    #allocation7 [shape = 'u8[512]{0}', space=vmem, size = 0x400, scoped, tag = 'input window, operand 2, single buffered']
    #allocation8 [shape = 'u8[32768]{0}', space=vmem, size = 0x8000, scoped, tag = 'input window, operand 3, single buffered']
    #allocation9 [shape = 's32[1]{0}', space=sflag, size = 0x4, scoped, tag = 'scoped memory for tpu_custom_call.1']
    #allocation10 [shape = 'u8[512]{0}', space=vmem, size = 0x400, scoped, tag = 'input window, operand 4, single buffered']
    #allocation11 [shape = 'u8[32768]{0}', space=vmem, size = 0x8000, scoped, tag = 'input window, operand 5, single buffered']
    #allocation12 [shape = 's32[1]{0}', space=sflag, size = 0x4, scoped, tag = 'scoped memory for tpu_custom_call.1']
    #allocation13 [shape = 'u8[512]{0}', space=vmem, size = 0x400, scoped, tag = 'input window, operand 6, single buffered']
    #allocation14 [shape = 'u8[4096]{0}', space=vmem, size = 0x1000, scoped, tag = 'output window, operand 0, single buffered']
    %12 = vsyncpa [#allocation3], 0
    %13 = vsyncpa [#allocation6], 0
    %14 = vsyncpa [#allocation9], 0
    %15 = vsyncpa [#allocation12], 0
    %16 = vsyncpa [#allocation4], 0
    // Predicated region
    $region2: #{tpu_custom_call.1} parent=1 // pred_check
      _
    $region3: #{tpu_custom_call.1} parent=1 // pred_check_branch
      %18 = sbr.rel (0) target = $region5
    $region4: #{tpu_custom_call.1} parent=1 // pred_region
      %s20 = ssub.s32 128, 128
      %21 = vsyncadd [#allocation3], %s20
      %s23 = sshll.u32 [#allocation2], 4
      %s24 = int_to_ptr.vmem [resolvable:$true] %s23
      %26 = dma.hbm_to_vmem [thread:$0]  %s0, 128, %s24, [#allocation3]
    $region5: #{tpu_custom_call.1} parent=1 // pred_fallthru
      _
    // Predicated region
    $region6: #{tpu_custom_call.1} parent=1 // pred_check
      _
    $region7: #{tpu_custom_call.1} parent=1 // pred_check_branch
      %28 = sbr.rel (0) target = $region9
    $region8: #{tpu_custom_call.1} parent=1 // pred_region
      %s30 = ssub.s32 128, 128
      %31 = vsyncadd [#allocation6], %s30
      %s32 = sshll.u32 [#allocation5], 4
      %s33 = int_to_ptr.vmem [resolvable:$true] %s32
      %38 = dma.hbm_to_vmem [thread:$0]  %s1, 128, %s33, [#allocation6], 64, 64, 4
    $region9: #{tpu_custom_call.1} parent=1 // pred_fallthru
      _
    // Predicated region
    $region10: #{tpu_custom_call.1} parent=1 // pred_check
      _
    $region11: #{tpu_custom_call.1} parent=1 // pred_check_branch
      %40 = sbr.rel (0) target = $region13
    $region12: #{tpu_custom_call.1} parent=1 // pred_region
      %s42 = ssub.s32 16, 16
      %43 = vsyncadd [#allocation6], %s42
      %s45 = sshll.u32 [#allocation7], 4
      %s46 = int_to_ptr.vmem [resolvable:$true] %s45
      %48 = dma.hbm_to_vmem [thread:$0]  %s2, 16, %s46, [#allocation6]
    $region13: #{tpu_custom_call.1} parent=1 // pred_fallthru
      _
    // Predicated region
    $region14: #{tpu_custom_call.1} parent=1 // pred_check
      _
    $region15: #{tpu_custom_call.1} parent=1 // pred_check_branch
      %50 = sbr.rel (0) target = $region17
    $region16: #{tpu_custom_call.1} parent=1 // pred_region
      %s52 = ssub.s32 1024, 1024
      %53 = vsyncadd [#allocation9], %s52
      %s54 = sshll.u32 [#allocation8], 4
      %s55 = int_to_ptr.vmem [resolvable:$true] %s54
      %60 = dma.hbm_to_vmem [thread:$0]  %s3, 1024, %s55, [#allocation9], 64, 64, 4
    $region17: #{tpu_custom_call.1} parent=1 // pred_fallthru
      _
    // Predicated region
    $region18: #{tpu_custom_call.1} parent=1 // pred_check
      _
    $region19: #{tpu_custom_call.1} parent=1 // pred_check_branch
      %62 = sbr.rel (0) target = $region21
    $region20: #{tpu_custom_call.1} parent=1 // pred_region
      %s64 = ssub.s32 16, 16
      %65 = vsyncadd [#allocation9], %s64
      %s67 = sshll.u32 [#allocation10], 4
      %s68 = int_to_ptr.vmem [resolvable:$true] %s67
      %70 = dma.hbm_to_vmem [thread:$0]  %s4, 16, %s68, [#allocation9]
    $region21: #{tpu_custom_call.1} parent=1 // pred_fallthru
      _
    // Predicated region
    $region22: #{tpu_custom_call.1} parent=1 // pred_check
      _
    $region23: #{tpu_custom_call.1} parent=1 // pred_check_branch
      %72 = sbr.rel (0) target = $region25
    $region24: #{tpu_custom_call.1} parent=1 // pred_region
      %s74 = ssub.s32 1024, 1024
      %75 = vsyncadd [#allocation12], %s74
      %s76 = sshll.u32 [#allocation11], 4
      %s77 = int_to_ptr.vmem [resolvable:$true] %s76
      %82 = dma.hbm_to_vmem [thread:$0]  %s5, 1024, %s77, [#allocation12], 64, 64, 4
    $region25: #{tpu_custom_call.1} parent=1 // pred_fallthru
      _
    // Predicated region
    $region26: #{tpu_custom_call.1} parent=1 // pred_check
      _
    $region27: #{tpu_custom_call.1} parent=1 // pred_check_branch
      %84 = sbr.rel (0) target = $region29
    $region28: #{tpu_custom_call.1} parent=1 // pred_region
      %s86 = ssub.s32 16, 16
      %87 = vsyncadd [#allocation12], %s86
      %s89 = sshll.u32 [#allocation13], 4
      %s90 = int_to_ptr.vmem [resolvable:$true] %s89
      %92 = dma.hbm_to_vmem [thread:$0]  %s6, 16, %s90, [#allocation12]
    $region29: #{tpu_custom_call.1} parent=1 // pred_fallthru
      _
    // Predicated region
    $region30: #{tpu_custom_call.1} parent=1 // pred_check
      _
    $region31: #{tpu_custom_call.1} parent=1 // pred_check_branch
      %94 = sbr.rel (0) target = $region33
    $region32: #{tpu_custom_call.1} parent=1 // pred_region
      %95 = dma.done [#allocation3], 128
    $region33: #{tpu_custom_call.1} parent=1 // pred_fallthru
      _
    // Predicated region
    $region34: #{tpu_custom_call.1} parent=1 // pred_check
      _
    $region35: #{tpu_custom_call.1} parent=1 // pred_check_branch
      %97 = sbr.rel (0) target = $region37
    $region36: #{tpu_custom_call.1} parent=1 // pred_region
      %98 = dma.done [#allocation6], 128
    $region37: #{tpu_custom_call.1} parent=1 // pred_fallthru
      _
    // Predicated region
    $region38: #{tpu_custom_call.1} parent=1 // pred_check
      _
    $region39: #{tpu_custom_call.1} parent=1 // pred_check_branch
      %100 = sbr.rel (0) target = $region41
    $region40: #{tpu_custom_call.1} parent=1 // pred_region
      %101 = dma.done [#allocation6], 16
    $region41: #{tpu_custom_call.1} parent=1 // pred_fallthru
      _
    // Predicated region
    $region42: #{tpu_custom_call.1} parent=1 // pred_check
      _
    $region43: #{tpu_custom_call.1} parent=1 // pred_check_branch
      %103 = sbr.rel (0) target = $region45
    $region44: #{tpu_custom_call.1} parent=1 // pred_region
      %104 = dma.done [#allocation9], 1024
    $region45: #{tpu_custom_call.1} parent=1 // pred_fallthru
      _
    // Predicated region
    $region46: #{tpu_custom_call.1} parent=1 // pred_check
      _
    $region47: #{tpu_custom_call.1} parent=1 // pred_check_branch
      %106 = sbr.rel (0) target = $region49
    $region48: #{tpu_custom_call.1} parent=1 // pred_region
      %107 = dma.done [#allocation9], 16
    $region49: #{tpu_custom_call.1} parent=1 // pred_fallthru
      _
    // Predicated region
    $region50: #{tpu_custom_call.1} parent=1 // pred_check
      _
    $region51: #{tpu_custom_call.1} parent=1 // pred_check_branch
      %109 = sbr.rel (0) target = $region53
    $region52: #{tpu_custom_call.1} parent=1 // pred_region
      %110 = dma.done [#allocation12], 1024
    $region53: #{tpu_custom_call.1} parent=1 // pred_fallthru
      _
    // Predicated region
    $region54: #{tpu_custom_call.1} parent=1 // pred_check
      _
    $region55: #{tpu_custom_call.1} parent=1 // pred_check_branch
      %112 = sbr.rel (0) target = $region57
    $region56: #{tpu_custom_call.1} parent=1 // pred_region
      %113 = dma.done [#allocation12], 16
    $region57: #{tpu_custom_call.1} parent=1 // pred_fallthru
      _
    %v115 = vld [vmem:[#allocation2] sm:$0xff]
    %v116 = vpack.c.bf16 %v115, %v115
    %v117 = vld [vmem:[#allocation5] sm:$0xf]
    %v118 = vld [vmem:[#allocation5 + $0x4] sm:$0xf]
    %v119 = vld [vmem:[#allocation7] sm:$0x1]
    %v121 = vlaneseq
    %v122 = vshrl.u32 %v121, 7
    %v123 = vsub.s32 0, %v122
    %v124 = vrot.slane %v119, %v123
    %v128 = vunpack.c.l.b16 %v117
    %v129 = vunpack.c.l.b16 %v118
    %v130 = vpack.c.b16 %v129, %v128
    %vm132 = vcmask 130048
    %v134 = vsel %vm132, %v116, 0
    %136 = vmatprep.subr.bf16.mxu0 0
    %137 = vmatpush1.bf16.msra.mxu0 %v130
    %138 = vmatprep.subr.bf16.mxu0 0
    %139 = vmatpush1.bf16.msra.mxu0 0
    %140 = vmatprep.subr.bf16.mxu0 0
    %141 = vmatpush1.bf16.msra.mxu0 0
    %142 = vmatprep.subr.bf16.mxu0 0
    %143 = vmatpush1.bf16.msra.mxu0 0
    %144 = vmatprep.subr.bf16.mxu0 0
    %145 = vmatpush1.bf16.msra.mxu0 0
    %146 = vmatprep.subr.bf16.mxu0 0
    %147 = vmatpush1.bf16.msra.mxu0 0
    %148 = vmatprep.subr.bf16.mxu0 0
    %149 = vmatpush1.bf16.msra.mxu0 0
    %150 = vmatprep.subr.bf16.mxu0 0
    %151 = vmatpush1.bf16.msra.mxu0 0
    %152 = vmatprep.subr.bf16.mxu0 0
    %153 = vmatpush1.bf16.msra.mxu0 0
    %154 = vmatprep.subr.bf16.mxu0 0
    %155 = vmatpush1.bf16.msra.mxu0 0
    %156 = vmatprep.subr.bf16.mxu0 0
    %157 = vmatpush1.bf16.msra.mxu0 0
    %158 = vmatprep.subr.bf16.mxu0 0
    %159 = vmatpush1.bf16.msra.mxu0 0
    %160 = vmatprep.subr.bf16.mxu0 0
    %161 = vmatpush1.bf16.msra.mxu0 0
    %162 = vmatprep.subr.bf16.mxu0 0
    %163 = vmatpush1.bf16.msra.mxu0 0
    %164 = vmatprep.subr.bf16.mxu0 0
    %165 = vmatpush1.bf16.msra.mxu0 0
    %166 = vmatprep.subr.bf16.mxu0 0
    %167 = vmatpush1.bf16.msra.mxu0 0
    %168 = vmatprep.mubr.bf16.mxu0 0
    %169 = vmatmul.mubr.bf16.gmra.mrb[0].mxu0 %v134
    %v170 = vpop.f32.mrb[0].mxu0
    %v171 = vadd.f32 %v124, %v170
    %v172 = vpop.f32.mrb[0].mxu0
    %v173 = vpop.f32.mrb[0].mxu0
    %v174 = vpop.f32.mrb[0].mxu0
    %175 = vdwg.mxu0
    %v176 = vtanh.pop %v171
    %v177 = vpack.c.bf16 %v176, %v176
    %v178 = vld [vmem:[#allocation8] sm:$0xf]
    %v179 = vld [vmem:[#allocation8 + $0x4] sm:$0xf]
    %v180 = vld [vmem:[#allocation8 + $0x8] sm:$0xf]
    %v181 = vld [vmem:[#allocation8 + $0xc] sm:$0xf]
    %v182 = vld [vmem:[#allocation8 + $0x10] sm:$0xf]
    %v183 = vld [vmem:[#allocation8 + $0x14] sm:$0xf]
    %v184 = vld [vmem:[#allocation8 + $0x18] sm:$0xf]
    %v185 = vld [vmem:[#allocation8 + $0x1c] sm:$0xf]
    %v186 = vld [vmem:[#allocation8 + $0x20] sm:$0xf]
    %v187 = vld [vmem:[#allocation8 + $0x24] sm:$0xf]
    %v188 = vld [vmem:[#allocation8 + $0x28] sm:$0xf]
    %v189 = vld [vmem:[#allocation8 + $0x2c] sm:$0xf]
    %v190 = vld [vmem:[#allocation8 + $0x30] sm:$0xf]
    %v191 = vld [vmem:[#allocation8 + $0x34] sm:$0xf]
    %v192 = vld [vmem:[#allocation8 + $0x38] sm:$0xf]
    %v193 = vld [vmem:[#allocation8 + $0x3c] sm:$0xf]
    %v194 = vld [vmem:[#allocation10] sm:$0x1]
    %v196 = vlaneseq
    %v197 = vshrl.u32 %v196, 7
    %v198 = vsub.s32 0, %v197
    %v199 = vrot.slane %v194, %v198
    %v217 = vunpack.c.l.b16 %v178
    %v218 = vunpack.c.l.b16 %v179
    %v219 = vunpack.c.l.b16 %v180
    %v220 = vunpack.c.l.b16 %v181
    %v221 = vunpack.c.l.b16 %v182
    %v222 = vunpack.c.l.b16 %v183
    %v223 = vunpack.c.l.b16 %v184
    %v224 = vunpack.c.l.b16 %v185
    %v225 = vunpack.c.l.b16 %v186
    %v226 = vunpack.c.l.b16 %v187
    %v227 = vunpack.c.l.b16 %v188
    %v228 = vunpack.c.l.b16 %v189
    %v229 = vunpack.c.l.b16 %v190
    %v230 = vunpack.c.l.b16 %v191
    %v231 = vunpack.c.l.b16 %v192
    %v232 = vunpack.c.l.b16 %v193
    %v233 = vpack.c.b16 %v218, %v217
    %v234 = vpack.c.b16 %v220, %v219
    %v235 = vpack.c.b16 %v222, %v221
    %v236 = vpack.c.b16 %v224, %v223
    %v237 = vpack.c.b16 %v226, %v225
    %v238 = vpack.c.b16 %v228, %v227
    %v239 = vpack.c.b16 %v230, %v229
    %v240 = vpack.c.b16 %v232, %v231
    %249 = vmatprep.subr.bf16.mxu0 0
    %250 = vmatpush1.bf16.msra.mxu0 %v233
    %251 = vmatprep.subr.bf16.mxu0 0
    %252 = vmatpush1.bf16.msra.mxu0 %v234
    %253 = vmatprep.subr.bf16.mxu0 0
    %254 = vmatpush1.bf16.msra.mxu0 %v235
    %255 = vmatprep.subr.bf16.mxu0 0
    %256 = vmatpush1.bf16.msra.mxu0 %v236
    %257 = vmatprep.subr.bf16.mxu0 0
    %258 = vmatpush1.bf16.msra.mxu0 %v237
    %259 = vmatprep.subr.bf16.mxu0 0
    %260 = vmatpush1.bf16.msra.mxu0 %v238
    %261 = vmatprep.subr.bf16.mxu0 0
    %262 = vmatpush1.bf16.msra.mxu0 %v239
    %263 = vmatprep.subr.bf16.mxu0 0
    %264 = vmatpush1.bf16.msra.mxu0 %v240
    %265 = vmatprep.subr.bf16.mxu0 0
    %266 = vmatpush1.bf16.msra.mxu0 0
    %267 = vmatprep.subr.bf16.mxu0 0
    %268 = vmatpush1.bf16.msra.mxu0 0
    %269 = vmatprep.subr.bf16.mxu0 0
    %270 = vmatpush1.bf16.msra.mxu0 0
    %271 = vmatprep.subr.bf16.mxu0 0
    %272 = vmatpush1.bf16.msra.mxu0 0
    %273 = vmatprep.subr.bf16.mxu0 0
    %274 = vmatpush1.bf16.msra.mxu0 0
    %275 = vmatprep.subr.bf16.mxu0 0
    %276 = vmatpush1.bf16.msra.mxu0 0
    %277 = vmatprep.subr.bf16.mxu0 0
    %278 = vmatpush1.bf16.msra.mxu0 0
    %279 = vmatprep.subr.bf16.mxu0 0
    %280 = vmatpush1.bf16.msra.mxu0 0
    %281 = vmatprep.mubr.bf16.mxu0 0
    %282 = vmatmul.mubr.bf16.gmra.mrb[0].mxu0 %v177
    %v283 = vpop.f32.mrb[0].mxu0
    %v284 = vadd.f32 %v199, %v283
    %v285 = vpop.f32.mrb[0].mxu0
    %v286 = vpop.f32.mrb[0].mxu0
    %v287 = vpop.f32.mrb[0].mxu0
    %288 = vdwg.mxu0
    %v289 = vtanh.pop %v284
    %v290 = vpack.c.bf16 %v289, %v289
    %v291 = vld [vmem:[#allocation11] sm:$0xf]
    %v292 = vld [vmem:[#allocation11 + $0x4] sm:$0xf]
    %v293 = vld [vmem:[#allocation11 + $0x8] sm:$0xf]
    %v294 = vld [vmem:[#allocation11 + $0xc] sm:$0xf]
    %v295 = vld [vmem:[#allocation11 + $0x10] sm:$0xf]
    %v296 = vld [vmem:[#allocation11 + $0x14] sm:$0xf]
    %v297 = vld [vmem:[#allocation11 + $0x18] sm:$0xf]
    %v298 = vld [vmem:[#allocation11 + $0x1c] sm:$0xf]
    %v299 = vld [vmem:[#allocation11 + $0x20] sm:$0xf]
    %v300 = vld [vmem:[#allocation11 + $0x24] sm:$0xf]
    %v301 = vld [vmem:[#allocation11 + $0x28] sm:$0xf]
    %v302 = vld [vmem:[#allocation11 + $0x2c] sm:$0xf]
    %v303 = vld [vmem:[#allocation11 + $0x30] sm:$0xf]
    %v304 = vld [vmem:[#allocation11 + $0x34] sm:$0xf]
    %v305 = vld [vmem:[#allocation11 + $0x38] sm:$0xf]
    %v306 = vld [vmem:[#allocation11 + $0x3c] sm:$0xf]
    %v307 = vld [vmem:[#allocation13] sm:$0x1]
    %v309 = vlaneseq
    %v310 = vshrl.u32 %v309, 7
    %v311 = vsub.s32 0, %v310
    %v312 = vrot.slane %v307, %v311
    %v330 = vunpack.c.l.b16 %v291
    %v331 = vunpack.c.l.b16 %v292
    %v332 = vunpack.c.l.b16 %v293
    %v333 = vunpack.c.l.b16 %v294
    %v334 = vunpack.c.l.b16 %v295
    %v335 = vunpack.c.l.b16 %v296
    %v336 = vunpack.c.l.b16 %v297
    %v337 = vunpack.c.l.b16 %v298
    %v338 = vunpack.c.l.b16 %v299
    %v339 = vunpack.c.l.b16 %v300
    %v340 = vunpack.c.l.b16 %v301
    %v341 = vunpack.c.l.b16 %v302
    %v342 = vunpack.c.l.b16 %v303
    %v343 = vunpack.c.l.b16 %v304
    %v344 = vunpack.c.l.b16 %v305
    %v345 = vunpack.c.l.b16 %v306
    %v346 = vpack.c.b16 %v331, %v330
    %v347 = vpack.c.b16 %v333, %v332
    %v348 = vpack.c.b16 %v335, %v334
    %v349 = vpack.c.b16 %v337, %v336
    %v350 = vpack.c.b16 %v339, %v338
    %v351 = vpack.c.b16 %v341, %v340
    %v352 = vpack.c.b16 %v343, %v342
    %v353 = vpack.c.b16 %v345, %v344
    %362 = vmatprep.subr.bf16.mxu0 0
    %363 = vmatpush1.bf16.msra.mxu0 %v346
    %364 = vmatprep.subr.bf16.mxu0 0
    %365 = vmatpush1.bf16.msra.mxu0 %v347
    %366 = vmatprep.subr.bf16.mxu0 0
    %367 = vmatpush1.bf16.msra.mxu0 %v348
    %368 = vmatprep.subr.bf16.mxu0 0
    %369 = vmatpush1.bf16.msra.mxu0 %v349
    %370 = vmatprep.subr.bf16.mxu0 0
    %371 = vmatpush1.bf16.msra.mxu0 %v350
    %372 = vmatprep.subr.bf16.mxu0 0
    %373 = vmatpush1.bf16.msra.mxu0 %v351
    %374 = vmatprep.subr.bf16.mxu0 0
    %375 = vmatpush1.bf16.msra.mxu0 %v352
    %376 = vmatprep.subr.bf16.mxu0 0
    %377 = vmatpush1.bf16.msra.mxu0 %v353
    %378 = vmatprep.subr.bf16.mxu0 0
    %379 = vmatpush1.bf16.msra.mxu0 0
    %380 = vmatprep.subr.bf16.mxu0 0
    %381 = vmatpush1.bf16.msra.mxu0 0
    %382 = vmatprep.subr.bf16.mxu0 0
    %383 = vmatpush1.bf16.msra.mxu0 0
    %384 = vmatprep.subr.bf16.mxu0 0
    %385 = vmatpush1.bf16.msra.mxu0 0
    %386 = vmatprep.subr.bf16.mxu0 0
    %387 = vmatpush1.bf16.msra.mxu0 0
    %388 = vmatprep.subr.bf16.mxu0 0
    %389 = vmatpush1.bf16.msra.mxu0 0
    %390 = vmatprep.subr.bf16.mxu0 0
    %391 = vmatpush1.bf16.msra.mxu0 0
    %392 = vmatprep.subr.bf16.mxu0 0
    %393 = vmatpush1.bf16.msra.mxu0 0
    %394 = vmatprep.mubr.bf16.mxu0 0
    %395 = vmatmul.mubr.bf16.gmra.mrb[0].mxu0 %v290
    %v396 = vpop.f32.mrb[0].mxu0
    %v397 = vadd.f32 %v312, %v396
    %v398 = vpop.f32.mrb[0].mxu0
    %v399 = vpop.f32.mrb[0].mxu0
    %v400 = vpop.f32.mrb[0].mxu0
    %401 = vdwg.mxu0
    %402 = vst [vmem:[#allocation14] sm:$0xff] %v397
    // Predicated region
    $region58: #{tpu_custom_call.1} parent=1 // pred_check
      _
    $region59: #{tpu_custom_call.1} parent=1 // pred_check_branch
      %404 = sbr.rel (0) target = $region61
    $region60: #{tpu_custom_call.1} parent=1 // pred_region
      %s406 = ssub.s32 128, 128
      %407 = vsyncadd [#allocation4], %s406
      %s409 = sshll.u32 [#allocation14], 4
      %s410 = int_to_ptr.vmem [resolvable:$true] %s409
      %412 = dma.vmem_to_hbm [thread:$0]  %s410, 128, %s7, [#allocation4]
    $region61: #{tpu_custom_call.1} parent=1 // pred_fallthru
      _
    // Predicated region
    $region62: #{tpu_custom_call.1} parent=1 // pred_check
      _
    $region63: #{tpu_custom_call.1} parent=1 // pred_check_branch
      %414 = sbr.rel (0) target = $region65
    $region64: #{tpu_custom_call.1} parent=1 // pred_region
      %415 = dma.done [#allocation4], 128
    $region65: #{tpu_custom_call.1} parent=1 // pred_fallthru
      _
    %416 = vsyncpa [#allocation3], 1
    %417 = vsyncpa [#allocation6], 1
    %418 = vsyncpa [#allocation9], 1
    %419 = vsyncpa [#allocation12], 1
    %420 = vsyncpa [#allocation4], 1

</llo_original>
